<compile_context>
chip_gen: v5e
topology: v5e:2x2
jax: 0.10.0
libtpu: 0.0.40
codegen_flags: <defaults>
</compile_context>

<pallas_src>
import math

import jax
import jax.numpy as jnp
from jax.experimental import pallas as pl
from jax.experimental.pallas import tpu as pltpu


def _gelu_tanh(x):
    # gelu_pytorch_tanh: 0.5 * x * (1 + tanh(sqrt(2/pi) * (x + 0.044715 * x^3)))
    c = math.sqrt(2.0 / math.pi)
    return 0.5 * x * (1.0 + jnp.tanh(c * (x + 0.044715 * x * x * x)))


def _round_up(a, b):
    return (a + b - 1) // b * b


def mlp_kernel(x_ref, wfc_ref, bfc_ref, wpj_ref, bpj_ref, o_ref, acc_ref):
    # Grid: (token tiles i, intermediate-dim reduction tiles k).
    # x_ref:   (tm, H)  bf16          wfc_ref: (H, ti) bf16   bfc_ref: (1, ti) f32
    # wpj_ref: (ti, H)  bf16          bpj_ref: (1, H)  f32
    # o_ref:   (tm, H)  out dtype     acc_ref: (tm, H) f32 scratch
    k = pl.program_id(1)

    @pl.when(k == 0)
    def _init():
        acc_ref[...] = jnp.zeros_like(acc_ref)

    # (tm, H) @ (H, ti) -> (tm, ti), f32 accumulation on the MXU.
    h = jnp.dot(x_ref[...], wfc_ref[...], preferred_element_type=jnp.float32)
    # c_fc bias + gelu_pytorch_tanh in f32, per I-tile (tanh goes to the EUP).
    h = _gelu_tanh(h + bfc_ref[...])
    # (tm, ti) @ (ti, H) accumulated into the resident f32 scratch.
    acc_ref[...] += jnp.dot(h.astype(wpj_ref.dtype), wpj_ref[...],
                            preferred_element_type=jnp.float32)

    @pl.when(k == pl.num_programs(1) - 1)
    def _finalize():
        # c_proj bias added once at the end; dropout is identity in eval mode.
        o_ref[...] = (acc_ref[...] + bpj_ref[...]).astype(o_ref.dtype)


def _default_vmem_budget():
    """Physical VMEM minus ~15% headroom for Mosaic internal scratch/semaphores.

    -> ~109 MiB on v5e/v6e (128 MiB physical), ~54 MiB on v7x (64 MiB physical).
    Falls back to a conservative 48 MiB (safe on every generation)."""
    try:
        info = pltpu.get_tpu_info()
        phys = getattr(info, "vmem_capacity_bytes", None)
        if phys:
            return int(phys * 0.85)
    except Exception:
        pass
    return 48 * 1024 * 1024


def _vmem_tile_bytes(tm, ti, H, in_itm, out_itm, single_buffer_out):
    """Rough per-grid-step VMEM footprint of the pipelined buffers + scratch."""
    x_b = 1 * tm * H * in_itm                 # single-buffered (i-only block)
    wfc_b = 2 * H * ti * in_itm               # double-buffered
    bfc_b = 2 * ti * 4
    wpj_b = 2 * ti * H * in_itm               # double-buffered
    bpj_b = 1 * H * 4                         # single-buffered (constant block)
    out_b = (1 if single_buffer_out else 2) * tm * H * out_itm
    acc_b = tm * H * 4                        # f32 accumulator scratch
    return x_b + wfc_b + bfc_b + wpj_b + bpj_b + out_b + acc_b


def gpt_bigcode_mlp(x, w_fc, b_fc, w_proj, b_proj, *, tm=512, ti=512,
                    compute_dtype=jnp.bfloat16, vmem_limit_bytes=None,
                    single_buffer_out=False):
    """x: [T, H]. w_fc: [H, I], w_proj: [I, H] (already transposed relative to
    torch's (out, in) Linear layout). Returns [T, H] in x.dtype.

    tm: token-tile rows. tm sets the flops-per-weight-byte ratio; use >=256 on
        v5e, >=512 on v6e/v7x (512-1024 on v5e/v6e where VMEM allows).
    ti: intermediate-dim reduction tile (512-1024 on v5e/v6e, 256-512 on v7x).
    vmem_limit_bytes: None -> derived from the device with ~15% headroom.
    single_buffer_out: single-buffer the output block too (reclaims a tm x H
        buffer; useful on VMEM-limited v7x, costs un-overlapped writeback)."""
    T, H = x.shape
    I = w_fc.shape[1]
    out_dtype = x.dtype
    in_itm = jnp.dtype(compute_dtype).itemsize
    out_itm = jnp.dtype(out_dtype).itemsize

    if vmem_limit_bytes is None:
        vmem_limit_bytes = _default_vmem_budget()

    # Clip tiles to the (aligned) problem size, keeping (8, 128) alignment.
    tm_eff = min(tm, _round_up(T, 8))
    ti_eff = min(ti, _round_up(I, 128))

    # Shrink tiles until the pipelined buffers fit the VMEM budget
    # (ti first -- it does not change arithmetic intensity -- then tm).
    while (_vmem_tile_bytes(tm_eff, ti_eff, H, in_itm, out_itm,
                            single_buffer_out) > vmem_limit_bytes
           and ti_eff > 256):
        ti_eff = max(256, _round_up(ti_eff // 2, 128))
    while (_vmem_tile_bytes(tm_eff, ti_eff, H, in_itm, out_itm,
                            single_buffer_out) > vmem_limit_bytes
           and tm_eff > 64):
        tm_eff = max(64, _round_up(tm_eff // 2, 8))

    # Guarantee >=2 token tiles so the "parallel" i axis can be split across
    # both v7x TensorCores (no effect on single-TC v5e/v6e beyond tile size).
    while -(-T // tm_eff) < 2 and tm_eff > 8:
        tm_eff = max(8, _round_up(tm_eff // 2, 8))

    T_pad = _round_up(T, tm_eff)
    I_pad = _round_up(I, ti_eff)

    # Pad tokens (extra rows sliced off at the end) and the intermediate dim
    # (zero c_fc columns + zero bias -> gelu(0)=0 -> exact no-op in c_proj).
    if T_pad != T:
        x = jnp.pad(x, ((0, T_pad - T), (0, 0)))
    if I_pad != I:
        w_fc = jnp.pad(w_fc, ((0, 0), (0, I_pad - I)))
        b_fc = jnp.pad(b_fc, (0, I_pad - I))
        w_proj = jnp.pad(w_proj, ((0, I_pad - I), (0, 0)))

    # bf16 operands; f32 accumulation happens inside the kernel.
    x = x.astype(compute_dtype)
    w_fc = w_fc.astype(compute_dtype)
    w_proj = w_proj.astype(compute_dtype)
    b_fc2 = b_fc.reshape(1, I_pad).astype(jnp.float32)
    b_pj2 = b_proj.reshape(1, H).astype(jnp.float32)

    num_i_tiles = T_pad // tm_eff
    grid = (num_i_tiles, I_pad // ti_eff)

    # Realistic HBM traffic: both weight matrices are re-streamed once per
    # token tile, plus activation read/write and biases.
    cost = pl.CostEstimate(
        flops=int(4 * T * H * I),                       # two matmuls
        transcendentals=int(T * I),                     # one tanh per interm. elt
        bytes_accessed=int(num_i_tiles * 2 * H * I_pad * in_itm
                           + T_pad * H * (in_itm + out_itm)
                           + (I_pad + H) * 4),
    )

    out_spec = pl.BlockSpec((tm_eff, H), lambda i, k: (i, 0),
                            pipeline_mode=pl.Buffered(1) if single_buffer_out
                            else None)

    out = pl.pallas_call(
        mlp_kernel,
        out_shape=jax.ShapeDtypeStruct((T_pad, H), out_dtype),
        grid_spec=pltpu.PrefetchScalarGridSpec(
            num_scalar_prefetch=0,
            grid=grid,
            in_specs=[
                # x only changes per i -> single-buffer it to reclaim VMEM for
                # larger tm/ti (exposed x DMA amortized over the whole k sweep).
                pl.BlockSpec((tm_eff, H), lambda i, k: (i, 0),
                             pipeline_mode=pl.Buffered(1)),
                pl.BlockSpec((H, ti_eff), lambda i, k: (0, k)),   # c_fc weights
                pl.BlockSpec((1, ti_eff), lambda i, k: (0, k)),   # c_fc bias
                pl.BlockSpec((ti_eff, H), lambda i, k: (k, 0)),   # c_proj weights
                # c_proj bias is constant across the whole grid -> single-buffer.
                pl.BlockSpec((1, H), lambda i, k: (0, 0),
                             pipeline_mode=pl.Buffered(1)),
            ],
            out_specs=out_spec,
            scratch_shapes=[pltpu.VMEM((tm_eff, H), jnp.float32)],
        ),
        compiler_params=pltpu.CompilerParams(
            dimension_semantics=("parallel", "arbitrary"),
            vmem_limit_bytes=int(vmem_limit_bytes),
        ),
        cost_estimate=cost,
    )(x, w_fc, b_fc2, w_proj, b_pj2)

    return out[:T]


if __name__ == "__main__":
    # Small config: hidden_size=32, intermediate_size=128, batch=2, seq=8
    B, S, H, I = 2, 8, 32, 128

    key = jax.random.PRNGKey(0)
    kx, kw1, kb1, kw2, kb2 = jax.random.split(key, 5)

    hidden_states = jax.random.normal(kx, (B, S, H), dtype=jnp.float32)

    # torch Linear stores (out, in); we build the transposed (in, out) layout
    # directly for the kernel.
    w_fc = jax.random.normal(kw1, (H, I), dtype=jnp.float32) * 0.02
    b_fc = jax.random.normal(kb1, (I,), dtype=jnp.float32) * 0.02
    w_proj = jax.random.normal(kw2, (I, H), dtype=jnp.float32) * 0.02
    b_proj = jax.random.normal(kb2, (H,), dtype=jnp.float32) * 0.02

    x2d = hidden_states.reshape(B * S, H)
    out2d = gpt_bigcode_mlp(x2d, w_fc, b_fc, w_proj, b_proj)
    out = out2d.reshape(B, S, H)
    jax.block_until_ready(out)

    # Reference in plain JAX using the same bf16-operand / f32-accumulate recipe.
    # (Intermediate activations are rounded to bf16 before c_proj, matching the
    # kernel; this deviates slightly from torch's all-f32 path -> tolerance.)
    xb = x2d.astype(jnp.bfloat16)
    h = jnp.dot(xb, w_fc.astype(jnp.bfloat16),
                preferred_element_type=jnp.float32) + b_fc
    h = _gelu_tanh(h)
    ref2d = jnp.dot(h.astype(jnp.bfloat16), w_proj.astype(jnp.bfloat16),
                    preferred_element_type=jnp.float32) + b_proj
    ref = ref2d.reshape(B, S, H).astype(out.dtype)

    assert jnp.allclose(out, ref, atol=2e-3, rtol=2e-3), "mismatch vs reference"

    print("KERNEL_OK")
</pallas_src>

<mosaic_0001>
module attributes {stable_mosaic.version = 11 : i64} {
  func.func @mlp_kernel(%arg0: i32, %arg1: i32, %arg2: memref<8x32xbf16, #tpu.memory_space<vmem>>, %arg3: memref<32x128xbf16, #tpu.memory_space<vmem>>, %arg4: memref<1x128xf32, #tpu.memory_space<vmem>>, %arg5: memref<128x32xbf16, #tpu.memory_space<vmem>>, %arg6: memref<1x32xf32, #tpu.memory_space<vmem>>, %arg7: memref<8x32xf32, #tpu.memory_space<vmem>>, %arg8: memref<8x32xf32, #tpu.memory_space<vmem>>) attributes {dimension_semantics = [#tpu.dimension_semantics<parallel>, #tpu.dimension_semantics<arbitrary>], iteration_bounds = array<i64: 2, 1>, scalar_prefetch = 0 : i64, scratch_operands = 1 : i64, tpu.core_type = #tpu.core_type<tc>, window_params = [{pipeline_mode = #tpu.pipeline_mode<synchronous>, transform_indices = @transform_0, window_bounds = array<i64: 8, 32>}, {transform_indices = @transform_1, window_bounds = array<i64: 32, 128>}, {transform_indices = @transform_2, window_bounds = array<i64: 1, 128>}, {transform_indices = @transform_3, window_bounds = array<i64: 128, 32>}, {pipeline_mode = #tpu.pipeline_mode<synchronous>, transform_indices = @transform_4, window_bounds = array<i64: 1, 32>}, {transform_indices = @transform_5, window_bounds = array<i64: 8, 32>}]} {
    %c0_i32 = arith.constant 0 : i32
    %0 = arith.cmpi eq, %arg1, %c0_i32 : i32
    %1 = arith.extui %0 : i1 to i32
    %c0_i32_0 = arith.constant 0 : i32
    %2 = arith.cmpi ne, %1, %c0_i32_0 : i32
    scf.if %2 {
      %cst_19 = arith.constant 0.000000e+00 : f32
      %31 = vector.broadcast %cst_19 : f32 to vector<8x32xf32>
      %c0_20 = arith.constant 0 : index
      %c0_21 = arith.constant 0 : index
      %32 = vector.load %arg8[%c0_20, %c0_21] : memref<8x32xf32, #tpu.memory_space<vmem>>, vector<8x32xf32>
      tpu.vector_store %arg8[%c0_20, %c0_21], %31 {strides = array<i32>} : memref<8x32xf32, #tpu.memory_space<vmem>>, vector<8x32xf32>,
    } else {
    }
    %c0 = arith.constant 0 : index
    %c0_1 = arith.constant 0 : index
    %3 = vector.load %arg2[%c0, %c0_1] : memref<8x32xbf16, #tpu.memory_space<vmem>>, vector<8x32xbf16>
    %c0_2 = arith.constant 0 : index
    %c0_3 = arith.constant 0 : index
    %4 = vector.load %arg3[%c0_2, %c0_3] : memref<32x128xbf16, #tpu.memory_space<vmem>>, vector<32x128xbf16>
    %cst = arith.constant dense<0.000000e+00> : vector<8x128xf32>
    %5 = tpu.matmul %3, %4, %cst {dimension_numbers = #tpu.dot_dimension_numbers<[1], [0], [0], [1], [0, 0, 1, 1], [], []>} : vector<8x32xbf16>, vector<32x128xbf16>, vector<8x128xf32> -> vector<8x128xf32>
    %c0_4 = arith.constant 0 : index
    %c0_5 = arith.constant 0 : index
    %6 = vector.load %arg4[%c0_4, %c0_5] : memref<1x128xf32, #tpu.memory_space<vmem>>, vector<1x128xf32>
    %7 = vector.broadcast %6 : vector<1x128xf32> to vector<8x128xf32>
    %8 = arith.addf %5, %7 : vector<8x128xf32>
    %cst_6 = arith.constant 5.000000e-01 : f32
    %9 = vector.broadcast %cst_6 : f32 to vector<8x128xf32>
    %10 = arith.mulf %9, %8 : vector<8x128xf32>
    %cst_7 = arith.constant 4.471500e-02 : f32
    %11 = vector.broadcast %cst_7 : f32 to vector<8x128xf32>
    %12 = arith.mulf %11, %8 : vector<8x128xf32>
    %13 = arith.mulf %12, %8 : vector<8x128xf32>
    %14 = arith.mulf %13, %8 : vector<8x128xf32>
    %15 = arith.addf %8, %14 : vector<8x128xf32>
    %cst_8 = arith.constant 0.797884583 : f32
    %16 = vector.broadcast %cst_8 : f32 to vector<8x128xf32>
    %17 = arith.mulf %16, %15 : vector<8x128xf32>
    %18 = math.tanh %17 : vector<8x128xf32>
    %cst_9 = arith.constant 1.000000e+00 : f32
    %19 = vector.broadcast %cst_9 : f32 to vector<8x128xf32>
    %20 = arith.addf %19, %18 : vector<8x128xf32>
    %21 = arith.mulf %10, %20 : vector<8x128xf32>
    %c0_10 = arith.constant 0 : index
    %c0_11 = arith.constant 0 : index
    %22 = vector.load %arg8[%c0_10, %c0_11] : memref<8x32xf32, #tpu.memory_space<vmem>>, vector<8x32xf32>
    %23 = arith.truncf %21 : vector<8x128xf32> to vector<8x128xbf16>
    %c0_12 = arith.constant 0 : index
    %c0_13 = arith.constant 0 : index
    %24 = vector.load %arg5[%c0_12, %c0_13] : memref<128x32xbf16, #tpu.memory_space<vmem>>, vector<128x32xbf16>
    %cst_14 = arith.constant dense<0.000000e+00> : vector<8x32xf32>
    %25 = tpu.matmul %23, %24, %cst_14 {dimension_numbers = #tpu.dot_dimension_numbers<[1], [0], [0], [1], [0, 0, 1, 1], [], []>} : vector<8x128xbf16>, vector<128x32xbf16>, vector<8x32xf32> -> vector<8x32xf32>
    %26 = arith.addf %22, %25 : vector<8x32xf32>
    %c0_15 = arith.constant 0 : index
    %c0_16 = arith.constant 0 : index
    %27 = vector.load %arg8[%c0_15, %c0_16] : memref<8x32xf32, #tpu.memory_space<vmem>>, vector<8x32xf32>
    tpu.vector_store %arg8[%c0_15, %c0_16], %26 {strides = array<i32>} : memref<8x32xf32, #tpu.memory_space<vmem>>, vector<8x32xf32>,
    %c0_i32_17 = arith.constant 0 : i32
    %28 = arith.cmpi eq, %arg1, %c0_i32_17 : i32
    %29 = arith.extui %28 : i1 to i32
    %c0_i32_18 = arith.constant 0 : i32
    %30 = arith.cmpi ne, %29, %c0_i32_18 : i32
    scf.if %30 {
      %c0_19 = arith.constant 0 : index
      %c0_20 = arith.constant 0 : index
      %31 = vector.load %arg8[%c0_19, %c0_20] : memref<8x32xf32, #tpu.memory_space<vmem>>, vector<8x32xf32>
      %c0_21 = arith.constant 0 : index
      %c0_22 = arith.constant 0 : index
      %32 = vector.load %arg6[%c0_21, %c0_22] : memref<1x32xf32, #tpu.memory_space<vmem>>, vector<1x32xf32>
      %33 = vector.broadcast %32 : vector<1x32xf32> to vector<8x32xf32>
      %34 = arith.addf %31, %33 : vector<8x32xf32>
      %c0_23 = arith.constant 0 : index
      %c0_24 = arith.constant 0 : index
      %35 = vector.load %arg7[%c0_23, %c0_24] : memref<8x32xf32, #tpu.memory_space<vmem>>, vector<8x32xf32>
      tpu.vector_store %arg7[%c0_23, %c0_24], %34 {strides = array<i32>} : memref<8x32xf32, #tpu.memory_space<vmem>>, vector<8x32xf32>,
    } else {
    }
    return
  }
  func.func @transform_0(%arg0: i32, %arg1: i32) -> (i32, i32) {
    %c0_i32 = arith.constant 0 : i32
    %c0_i32_0 = arith.constant 0 : i32
    return %arg0, %c0_i32 : i32, i32
  }
  func.func @transform_1(%arg0: i32, %arg1: i32) -> (i32, i32) {
    %c0_i32 = arith.constant 0 : i32
    %c0_i32_0 = arith.constant 0 : i32
    return %c0_i32, %arg1 : i32, i32
  }
  func.func @transform_2(%arg0: i32, %arg1: i32) -> (i32, i32) {
    %c0_i32 = arith.constant 0 : i32
    %c0_i32_0 = arith.constant 0 : i32
    return %c0_i32, %arg1 : i32, i32
  }
  func.func @transform_3(%arg0: i32, %arg1: i32) -> (i32, i32) {
    %c0_i32 = arith.constant 0 : i32
    %c0_i32_0 = arith.constant 0 : i32
    return %arg1, %c0_i32 : i32, i32
  }
  func.func @transform_4(%arg0: i32, %arg1: i32) -> (i32, i32) {
    %c0_i32 = arith.constant 0 : i32
    %c0_i32_0 = arith.constant 0 : i32
    %c0_i32_1 = arith.constant 0 : i32
    return %c0_i32, %c0_i32_0 : i32, i32
  }
  func.func @transform_5(%arg0: i32, %arg1: i32) -> (i32, i32) {
    %c0_i32 = arith.constant 0 : i32
    %c0_i32_0 = arith.constant 0 : i32
    return %arg0, %c0_i32 : i32, i32
  }
}

</mosaic_0001>

<llo_original>
// kernel: tpu_custom_call.1
$region0: #{tpu_custom_call.1}
  #allocation0 [shape = 'u32[]', space=smem, size = 0x4, offset = 0x4, fixed_abs, tag = 'smem constant byte address 0x4 - core index']
  #allocation1 [shape = 'u32[72,128]{1,0:T(1,128)}', space=vmem, size = 0x9000, scoped, tag = 'internal scratch']
  #allocation2 [shape = 'f32[8,32]{1,0:T(8,128)}', space=vmem, size = 0x1000, scoped, tag = 'scratch operand']
  %s0 = inlined_call_operand.vmem [shape: bf16[16,32], index: 0, kind: input, shape index: {}]
  %s1 = inlined_call_operand.vmem [shape: bf16[32,128], index: 1, kind: input, shape index: {}]
  %s2 = inlined_call_operand.vmem [shape: f32[1,128], index: 2, kind: input, shape index: {}]
  %s3 = inlined_call_operand.vmem [shape: bf16[128,32], index: 3, kind: input, shape index: {}]
  %s4 = inlined_call_operand.vmem [shape: f32[1,32], index: 4, kind: input, shape index: {}]
  %s5 = inlined_call_operand.hbm [shape: f32[16,32], index: 5, kind: output, shape index: {}]
  %s6 = sld [smem:[#allocation0]]
  $region61: #{tpu_custom_call.1} parent=0
    _
  %s8 = ssub.s32 1, %s6
  %s9 = scalar_select 0, %s8, %s6
  $region1: #{tpu_custom_call.1} parent=0
    #allocation3 [shape = 'u8[8192]{0}', space=vmem, size = 0x2000, scoped, tag = 'output window, operand 0']
    #allocation4 [shape = 's32[2]{0}', space=sflag, size = 0x8, scoped, tag = 'scoped memory for tpu_custom_call.1']
    %10 = vsyncpa [#allocation4], 0
    %s11 = scalar_lea.sflag [#allocation4], 1
    %12 = vsyncpa %s11, 0
    loop: start=0, step=1, limit=4
    $region2: #{tpu_custom_call.1} parent=1 // loop_pre_header
      _
    $region3: #{tpu_custom_call.1} parent=1 // loop_header
      %s14 = sphi 0, %s18
      %p15 = scmp.ge.s32.totalorder %s14, 4
      %s21 = sphi 0, %s33
      %s22 = sphi 0, %s29
      %s23 = sphi 0, %s21
      %s24 = sphi 0, %s22
      %s25 = sphi 0, %s23
      %s26 = sphi 0, %s24
      %s36 = sphi 0, %s38
      %s39 = sphi 0, %s36
      %s40 = sphi 0, %s39
      %s56 = sphi 0, %s40
      %s62 = sphi 0, %s64
      %s65 = sphi 0, %s62
      %s66 = sphi 0, %s65
      %s82 = sphi 0, %s66
      %s88 = sphi 0, %s90
      %s91 = sphi 0, %s88
      %s92 = sphi 0, %s91
      %s108 = sphi 0, %s92
      %s114 = sphi 0, %s116
      %s117 = sphi 0, %s114
      %s118 = sphi 0, %s117
      %s134 = sphi 0, %s118
      %s138 = sphi 0, %s138
      %s140 = sphi 0, %s138
      %s141 = sphi 0, %s140
      %s155 = sphi 0, %s141
      %s161 = sphi 0, %s163
      %s164 = sphi 0, %s161
      %s165 = sphi 0, %s164
      %s181 = sphi 0, %s165
    $region4: #{tpu_custom_call.1} parent=1 // loop_header_branch
      %17 = sbr.rel (%p15) target = $region8
    $region5: #{tpu_custom_call.1} parent=1 // loop_body
      %s19 = ssub.s32 %s14, 1
      %s20 = ssub.s32 %s14, 2
      %s27 = sadd.s32 1, %s22
      %p28 = scmp.ge.s32.totalorder %s27, 1
      %s29 = scalar_select %p28, 0, %s27
      %s30 = sadd.s32 1, %s21
      %s31 = scalar_select %p28, %s30, %s21
      %p32 = scmp.ge.s32.totalorder %s31, 2
      %s33 = scalar_select %p32, 0, %s31
      %s34 = ssub.s32 %s21, %s33
      %p35 = scmp.eq.s32.totalorder %s34, 0
      %s37 = sadd.s32 %s36, 1
      %s38 = scalar_select %p35, %s36, %s37
      %p41 = pneg %p35
      %p42 = scmp.eq.s32.totalorder %s14, 1
      %p43 = por %p41, %p42
      %p44 = scmp.ne.s32.totalorder %s36, %s39
      %p45 = scmp.eq.s32.totalorder %s14, 0
      %p46 = por %p44, %p45
      %p47 = scmp.ne.s32.totalorder %s36, %s39
      %p48 = scmp.eq.s32.totalorder %s19, 1
      %p49 = por %p47, %p48
      %p50 = scmp.ne.s32.totalorder %s39, %s40
      %p51 = scmp.eq.s32.totalorder %s19, 0
      %p52 = por %p50, %p51
      %p53 = scmp.ne.s32.totalorder %s39, %s40
      %p54 = scmp.eq.s32.totalorder %s20, 1
      %p55 = por %p53, %p54
      %p57 = scmp.ne.s32.totalorder %s40, %s56
      %p58 = scmp.eq.s32.totalorder %s20, 0
      %p59 = por %p57, %p58
      %s60 = ssub.s32 %s22, %s29
      %p61 = scmp.eq.s32.totalorder %s60, 0
      %s63 = sadd.s32 %s62, 1
      %s64 = scalar_select %p61, %s62, %s63
      %p67 = pneg %p61
      %p68 = scmp.eq.s32.totalorder %s14, 1
      %p69 = por %p67, %p68
      %p70 = scmp.ne.s32.totalorder %s62, %s65
      %p71 = scmp.eq.s32.totalorder %s14, 0
      %p72 = por %p70, %p71
      %p73 = scmp.ne.s32.totalorder %s62, %s65
      %p74 = scmp.eq.s32.totalorder %s19, 1
      %p75 = por %p73, %p74
      %p76 = scmp.ne.s32.totalorder %s65, %s66
      %p77 = scmp.eq.s32.totalorder %s19, 0
      %p78 = por %p76, %p77
      %p79 = scmp.ne.s32.totalorder %s65, %s66
      %p80 = scmp.eq.s32.totalorder %s20, 1
      %p81 = por %p79, %p80
      %p83 = scmp.ne.s32.totalorder %s66, %s82
      %p84 = scmp.eq.s32.totalorder %s20, 0
      %p85 = por %p83, %p84
      %s86 = ssub.s32 %s22, %s29
      %p87 = scmp.eq.s32.totalorder %s86, 0
      %s89 = sadd.s32 %s88, 1
      %s90 = scalar_select %p87, %s88, %s89
      %p93 = pneg %p87
      %p94 = scmp.eq.s32.totalorder %s14, 1
      %p95 = por %p93, %p94
      %p96 = scmp.ne.s32.totalorder %s88, %s91
      %p97 = scmp.eq.s32.totalorder %s14, 0
      %p98 = por %p96, %p97
      %p99 = scmp.ne.s32.totalorder %s88, %s91
      %p100 = scmp.eq.s32.totalorder %s19, 1
      %p101 = por %p99, %p100
      %p102 = scmp.ne.s32.totalorder %s91, %s92
      %p103 = scmp.eq.s32.totalorder %s19, 0
      %p104 = por %p102, %p103
      %p105 = scmp.ne.s32.totalorder %s91, %s92
      %p106 = scmp.eq.s32.totalorder %s20, 1
      %p107 = por %p105, %p106
      %p109 = scmp.ne.s32.totalorder %s92, %s108
      %p110 = scmp.eq.s32.totalorder %s20, 0
      %p111 = por %p109, %p110
      %s112 = ssub.s32 %s22, %s29
      %p113 = scmp.eq.s32.totalorder %s112, 0
      %s115 = sadd.s32 %s114, 1
      %s116 = scalar_select %p113, %s114, %s115
      %p119 = pneg %p113
      %p120 = scmp.eq.s32.totalorder %s14, 1
      %p121 = por %p119, %p120
      %p122 = scmp.ne.s32.totalorder %s114, %s117
      %p123 = scmp.eq.s32.totalorder %s14, 0
      %p124 = por %p122, %p123
      %p125 = scmp.ne.s32.totalorder %s114, %s117
      %p126 = scmp.eq.s32.totalorder %s19, 1
      %p127 = por %p125, %p126
      %p128 = scmp.ne.s32.totalorder %s117, %s118
      %p129 = scmp.eq.s32.totalorder %s19, 0
      %p130 = por %p128, %p129
      %p131 = scmp.ne.s32.totalorder %s117, %s118
      %p132 = scmp.eq.s32.totalorder %s20, 1
      %p133 = por %p131, %p132
      %p135 = scmp.ne.s32.totalorder %s118, %s134
      %p136 = scmp.eq.s32.totalorder %s20, 0
      %p137 = por %p135, %p136
      %s139 = sadd.s32 %s138, 1
      %p142 = scmp.eq.s32.totalorder %s14, 1
      %p143 = scmp.ne.s32.totalorder %s138, %s140
      %p144 = scmp.eq.s32.totalorder %s14, 0
      %p145 = por %p143, %p144
      %p146 = scmp.ne.s32.totalorder %s138, %s140
      %p147 = scmp.eq.s32.totalorder %s19, 1
      %p148 = por %p146, %p147
      %p149 = scmp.ne.s32.totalorder %s140, %s141
      %p150 = scmp.eq.s32.totalorder %s19, 0
      %p151 = por %p149, %p150
      %p152 = scmp.ne.s32.totalorder %s140, %s141
      %p153 = scmp.eq.s32.totalorder %s20, 1
      %p154 = por %p152, %p153
      %p156 = scmp.ne.s32.totalorder %s141, %s155
      %p157 = scmp.eq.s32.totalorder %s20, 0
      %p158 = por %p156, %p157
      %s159 = ssub.s32 %s21, %s33
      %p160 = scmp.eq.s32.totalorder %s159, 0
      %s162 = sadd.s32 %s161, 1
      %s163 = scalar_select %p160, %s161, %s162
      %p166 = pneg %p160
      %p167 = scmp.eq.s32.totalorder %s14, 1
      %p168 = por %p166, %p167
      %p169 = scmp.ne.s32.totalorder %s161, %s164
      %p170 = scmp.eq.s32.totalorder %s14, 0
      %p171 = por %p169, %p170
      %p172 = scmp.ne.s32.totalorder %s161, %s164
      %p173 = scmp.eq.s32.totalorder %s19, 1
      %p174 = por %p172, %p173
      %p175 = scmp.ne.s32.totalorder %s164, %s165
      %p176 = scmp.eq.s32.totalorder %s19, 0
      %p177 = por %p175, %p176
      %p178 = scmp.ne.s32.totalorder %s164, %s165
      %p179 = scmp.eq.s32.totalorder %s20, 1
      %p180 = por %p178, %p179
      %p182 = scmp.ne.s32.totalorder %s165, %s181
      %p183 = scmp.eq.s32.totalorder %s20, 0
      %p184 = por %p182, %p183
      %p185 = scmp.le.s32.totalorder 1, %s14
      %p186 = scmp.lt.s32.totalorder %s14, 3
      %p187 = pnand %p185, %p186
      %p188 = pneg %p187
      // Predicated region
      $region9: #{tpu_custom_call.1} parent=5 // pred_check
        _
      $region10: #{tpu_custom_call.1} parent=5 // pred_check_branch
        %190 = sbr.rel (%p187) target = $region12
      $region11: #{tpu_custom_call.1} parent=5 // pred_region
        %s191 = ssub.s32 %s14, 1
        // Predicated region
        $region13: #{tpu_custom_call.1} parent=11 // pred_check
          %p192 = pneg %p52
        $region14: #{tpu_custom_call.1} parent=11 // pred_check_branch
          %194 = sbr.rel (%p192) target = $region16
        $region15: #{tpu_custom_call.1} parent=11 // pred_region
          %p195 = scmp.lt.s32.totalorder %s23, 1
          %s196 = scalar_select %p195, %s23, 1
          %s197 = smul.addr %s196, 4
          %s198 = scalar_lea.vmem %s0, %s197
        $region16: #{tpu_custom_call.1} parent=11 // pred_fallthru
          _
        // Predicated region
        $region17: #{tpu_custom_call.1} parent=11 // pred_check
          %p199 = pneg %p78
        $region18: #{tpu_custom_call.1} parent=11 // pred_check_branch
          %201 = sbr.rel (%p199) target = $region20
        $region19: #{tpu_custom_call.1} parent=11 // pred_region
          %p202 = scmp.lt.s32.totalorder %s24, 0
          %s203 = scalar_select %p202, %s24, 0
          %s204 = smul.addr %s203, 4
          %s205 = scalar_lea.vmem %s1, %s204
        $region20: #{tpu_custom_call.1} parent=11 // pred_fallthru
          _
        // Predicated region
        $region21: #{tpu_custom_call.1} parent=11 // pred_check
          %p206 = pneg %p104
        $region22: #{tpu_custom_call.1} parent=11 // pred_check_branch
          %208 = sbr.rel (%p206) target = $region24
        $region23: #{tpu_custom_call.1} parent=11 // pred_region
          %p209 = scmp.lt.s32.totalorder %s24, 0
          %s210 = scalar_select %p209, %s24, 0
          %s211 = scalar_lea.vmem %s2, %s210
        $region24: #{tpu_custom_call.1} parent=11 // pred_fallthru
          _
        // Predicated region
        $region25: #{tpu_custom_call.1} parent=11 // pred_check
          %p212 = pneg %p130
        $region26: #{tpu_custom_call.1} parent=11 // pred_check_branch
          %214 = sbr.rel (%p212) target = $region28
        $region27: #{tpu_custom_call.1} parent=11 // pred_region
          %s215 = smul.u32 16, %s24
          %p216 = scmp.lt.s32.totalorder %s215, 15
          %s217 = scalar_select %p216, %s215, 15
          %s218 = smul.addr %s217, 4
          %s219 = scalar_lea.vmem %s3, %s218
          %s220 = smul.u32 16, %s24
        $region28: #{tpu_custom_call.1} parent=11 // pred_fallthru
          _
        // Predicated region
        $region29: #{tpu_custom_call.1} parent=11 // pred_check
          %p221 = pneg %p151
        $region30: #{tpu_custom_call.1} parent=11 // pred_check_branch
          %223 = sbr.rel (%p221) target = $region32
        $region31: #{tpu_custom_call.1} parent=11 // pred_region
          _
        $region32: #{tpu_custom_call.1} parent=11 // pred_fallthru
          _
      $region12: #{tpu_custom_call.1} parent=5 // pred_fallthru
        _
      %p224 = scmp.lt.s32.totalorder %s14, 2
      // Predicated region
      $region33: #{tpu_custom_call.1} parent=5 // pred_check
        %p225 = pneg %p224
      $region34: #{tpu_custom_call.1} parent=5 // pred_check_branch
        %227 = sbr.rel (%p225) target = $region36
      $region35: #{tpu_custom_call.1} parent=5 // pred_region
        _
      $region36: #{tpu_custom_call.1} parent=5 // pred_fallthru
        _
      %p228 = scmp.le.s32.totalorder 1, %s14
      %p229 = scmp.lt.s32.totalorder %s14, 3
      %p230 = pnand %p228, %p229
      %p231 = pneg %p230
      // Predicated region
      $region37: #{tpu_custom_call.1} parent=5 // pred_check
        _
      $region38: #{tpu_custom_call.1} parent=5 // pred_check_branch
        %233 = sbr.rel (%p230) target = $region40
      $region39: #{tpu_custom_call.1} parent=5 // pred_region
        %s234 = ssub.s32 %s14, 1
        %p235 = scmp.lt.s32.totalorder %s23, 1
        %s236 = scalar_select %p235, %s23, 1
        %s237 = smul.addr %s236, 4
        %s238 = scalar_lea.vmem %s0, %s237
        %p239 = pneg %p52
        %p240 = pneg %p49
        %p241 = scmp.lt.s32.totalorder %s24, 0
        %s242 = scalar_select %p241, %s24, 0
        %s243 = smul.addr %s242, 4
        %s244 = scalar_lea.vmem %s1, %s243
        %p245 = pneg %p78
        %p246 = pneg %p75
        %p247 = scmp.lt.s32.totalorder %s24, 0
        %s248 = scalar_select %p247, %s24, 0
        %s249 = scalar_lea.vmem %s2, %s248
        %p250 = pneg %p104
        %p251 = pneg %p101
        %s252 = smul.u32 16, %s24
        %p253 = scmp.lt.s32.totalorder %s252, 15
        %s254 = scalar_select %p253, %s252, 15
        %s255 = smul.addr %s254, 4
        %s256 = scalar_lea.vmem %s3, %s255
        %p257 = pneg %p130
        %p258 = pneg %p127
        %p259 = pneg %p151
        %p260 = pneg %p148
        %p261 = pneg %p177
        %p262 = pneg %p174
        %s263 = sand.u32 %s164, 1
        %s264 = scalar_lea.sflag [#allocation4], %s263
        %s265 = sand.u32 %s164, 1
        %s266 = smul.addr %s265, 8
        %s267 = scalar_lea.vmem [#allocation3], %s266
        %p268 = scmp.lt.s32.totalorder %s23, 1
        %s269 = scalar_select %p268, %s23, 1
        %s270 = smul.addr %s269, 4
        %s271 = scalar_lea.vmem %s0, %s270
        %p272 = scmp.lt.s32.totalorder %s24, 0
        %s273 = scalar_select %p272, %s24, 0
        %s274 = smul.addr %s273, 4
        %s275 = scalar_lea.vmem %s1, %s274
        %p276 = scmp.lt.s32.totalorder %s24, 0
        %s277 = scalar_select %p276, %s24, 0
        %s278 = scalar_lea.vmem %s2, %s277
        %s279 = smul.u32 16, %s24
        %p280 = scmp.lt.s32.totalorder %s279, 15
        %s281 = scalar_select %p280, %s279, 15
        %s282 = smul.addr %s281, 4
        %s283 = scalar_lea.vmem %s3, %s282
        %s284 = smul.u32 16, %s24
        %p286 = scmp.eq.s32.totalorder %s24, 0
        // Predicated region
        $region41: #{tpu_custom_call.1} parent=39 // pred_check
          %p287 = pneg %p286
        $region42: #{tpu_custom_call.1} parent=39 // pred_check_branch
          %289 = sbr.rel (%p287) target = $region44
        $region43: #{tpu_custom_call.1} parent=39 // pred_region
          %vm290 = vcmask 261120
          %291 = vst.msk [vmem:[#allocation2] sm:$0xff] %vm290, 0.0
        $region44: #{tpu_custom_call.1} parent=39 // pred_fallthru
          _
        %v292 = vld [vmem:[%s271] sm:$0xf]
        %v293 = vld [vmem:[%s275] sm:$0xf]
        %v294 = vld [vmem:[%s275 + $0x4] sm:$0xf]
        %v295 = vld [vmem:[%s275 + $0x8] sm:$0xf]
        %v296 = vld [vmem:[%s275 + $0xc] sm:$0xf]
        %v297 = vld [vmem:[%s278] sm:$0x1]
        %v299 = vperm.slane %v297, 0
        %v305 = vunpack.c.l.b16 %v293
        %v306 = vunpack.c.l.b16 %v294
        %v307 = vunpack.c.l.b16 %v295
        %v308 = vunpack.c.l.b16 %v296
        %v309 = vpack.c.b16 %v306, %v305
        %v310 = vpack.c.b16 %v308, %v307
        %vm313 = vcmask 261120
        %v315 = vsel %vm313, %v292, 0
        %317 = vmatpush.bf16.msra.mxu0 0
        %318 = vmatpush.bf16.msra.mxu0 0
        %319 = vmatpush.bf16.msra.mxu0 0
        %320 = vmatpush.bf16.msra.mxu0 0
        %321 = vmatpush.bf16.msra.mxu0 0
        %322 = vmatpush.bf16.msra.mxu0 0
        %323 = vmatpush.bf16.msra.mxu0 %v310
        %324 = vmatpush.bf16.msra.mxu0 %v309
        %325 = vmatmul.bf16.gmra.mxu0 %v315
        %v326 = vpop.f32.mrf.mxu0
        %v327 = vadd.f32 %v299, %v326
        %v328 = vpop.f32.mrf.mxu0
        %329 = vdwg.mxu0
        %v330 = vmul.f32 %v327, 0.5
        %v331 = vmul.f32 %v327, 0.044715
        %v332 = vmul.f32 %v331, %v327
        %v333 = vmul.f32 %v332, %v327
        %v334 = vadd.f32 %v327, %v333
        %v335 = vmul.f32 %v334, 0.7978846
        %v336 = vtanh.pop %v335
        %v337 = vadd.f32 %v336, 1.0
        %v338 = vmul.f32 %v330, %v337
        %v339 = vld [vmem:[#allocation2] sm:$0xff]
        %v340 = vpack.c.bf16 %v338, %v338
        %v341 = vld [vmem:[%s283] sm:$0xf]
        %v342 = vld [vmem:[%s283 + $0x4] sm:$0xf]
        %v343 = vld [vmem:[%s283 + $0x8] sm:$0xf]
        %v344 = vld [vmem:[%s283 + $0xc] sm:$0xf]
        %v345 = vld [vmem:[%s283 + $0x10] sm:$0xf]
        %v346 = vld [vmem:[%s283 + $0x14] sm:$0xf]
        %v347 = vld [vmem:[%s283 + $0x18] sm:$0xf]
        %v348 = vld [vmem:[%s283 + $0x1c] sm:$0xf]
        %v349 = vld [vmem:[%s283 + $0x20] sm:$0xf]
        %v350 = vld [vmem:[%s283 + $0x24] sm:$0xf]
        %v351 = vld [vmem:[%s283 + $0x28] sm:$0xf]
        %v352 = vld [vmem:[%s283 + $0x2c] sm:$0xf]
        %v353 = vld [vmem:[%s283 + $0x30] sm:$0xf]
        %v354 = vld [vmem:[%s283 + $0x34] sm:$0xf]
        %v355 = vld [vmem:[%s283 + $0x38] sm:$0xf]
        %v356 = vld [vmem:[%s283 + $0x3c] sm:$0xf]
        %v373 = vunpack.c.l.b16 %v341
        %v374 = vunpack.c.l.b16 %v342
        %v375 = vunpack.c.l.b16 %v343
        %v376 = vunpack.c.l.b16 %v344
        %v377 = vunpack.c.l.b16 %v345
        %v378 = vunpack.c.l.b16 %v346
        %v379 = vunpack.c.l.b16 %v347
        %v380 = vunpack.c.l.b16 %v348
        %v381 = vunpack.c.l.b16 %v349
        %v382 = vunpack.c.l.b16 %v350
        %v383 = vunpack.c.l.b16 %v351
        %v384 = vunpack.c.l.b16 %v352
        %v385 = vunpack.c.l.b16 %v353
        %v386 = vunpack.c.l.b16 %v354
        %v387 = vunpack.c.l.b16 %v355
        %v388 = vunpack.c.l.b16 %v356
        %v389 = vpack.c.b16 %v374, %v373
        %v390 = vpack.c.b16 %v376, %v375
        %v391 = vpack.c.b16 %v378, %v377
        %v392 = vpack.c.b16 %v380, %v379
        %v393 = vpack.c.b16 %v382, %v381
        %v394 = vpack.c.b16 %v384, %v383
        %v395 = vpack.c.b16 %v386, %v385
        %v396 = vpack.c.b16 %v388, %v387
        %405 = vmatpush.bf16.msra.mxu0 %v396
        %406 = vmatpush.bf16.msra.mxu0 %v395
        %407 = vmatpush.bf16.msra.mxu0 %v394
        %408 = vmatpush.bf16.msra.mxu0 %v393
        %409 = vmatpush.bf16.msra.mxu0 %v392
        %410 = vmatpush.bf16.msra.mxu0 %v391
        %411 = vmatpush.bf16.msra.mxu0 %v390
        %412 = vmatpush.bf16.msra.mxu0 %v389
        %413 = vmatmul.bf16.gmra.mxu0 %v340
        %v414 = vpop.f32.mrf.mxu0
        %v415 = vadd.f32 0.0, %v414
        %v416 = vpop.f32.mrf.mxu0
        %417 = vdwg.mxu0
        %v418 = vadd.f32 %v339, %v415
        %419 = vst.msk [vmem:[#allocation2] sm:$0xff] %vm313, %v418
        // Predicated region
        $region45: #{tpu_custom_call.1} parent=39 // pred_check
          %p420 = pneg %p286
        $region46: #{tpu_custom_call.1} parent=39 // pred_check_branch
          %422 = sbr.rel (%p420) target = $region48
        $region47: #{tpu_custom_call.1} parent=39 // pred_region
          %v423 = vld [vmem:[#allocation2] sm:$0xff]
          %v424 = vld [vmem:[%s4] sm:$0x1]
          %v426 = vperm.slane %v424, 0
          %v428 = vadd.f32 %v423, %v426
          %429 = vst.msk [vmem:[%s267] sm:$0xff] %vm313, %v428
        $region48: #{tpu_custom_call.1} parent=39 // pred_fallthru
          _
        %s430 = sand.u32 %s164, 1
        %s431 = scalar_lea.sflag [#allocation4], %s430
        %s432 = sand.u32 %s164, 1
        %s433 = smul.addr %s432, 8
        %s434 = scalar_lea.vmem [#allocation3], %s433
        // Predicated region
        $region49: #{tpu_custom_call.1} parent=39 // pred_check
          %p435 = pneg %p174
        $region50: #{tpu_custom_call.1} parent=39 // pred_check_branch
          %437 = sbr.rel (%p435) target = $region52
        $region51: #{tpu_custom_call.1} parent=39 // pred_region
          %439 = vsyncadd %s431, 0
          %s440 = smul.addr %s23, 8
          %s441 = scalar_lea.hbm %s5, %s440
          %s443 = sshll.u32 %s434, 4
          %s444 = int_to_ptr.vmem [resolvable:$true] %s443
          %s445 = sshll.u32 %s441, 4
          %s446 = int_to_ptr.hbm [resolvable:$true] %s445
          %448 = dma.vmem_to_hbm [thread:$0]  %s444, 128, %s446, %s431
        $region52: #{tpu_custom_call.1} parent=39 // pred_fallthru
          _
      $region40: #{tpu_custom_call.1} parent=5 // pred_fallthru
        _
      %p449 = scmp.le.s32.totalorder 2, %s14
      // Predicated region
      $region53: #{tpu_custom_call.1} parent=5 // pred_check
        %p450 = pneg %p449
      $region54: #{tpu_custom_call.1} parent=5 // pred_check_branch
        %452 = sbr.rel (%p450) target = $region56
      $region55: #{tpu_custom_call.1} parent=5 // pred_region
        %s453 = ssub.s32 %s14, 2
        // Predicated region
        $region57: #{tpu_custom_call.1} parent=55 // pred_check
          %p454 = pneg %p180
        $region58: #{tpu_custom_call.1} parent=55 // pred_check_branch
          %456 = sbr.rel (%p454) target = $region60
        $region59: #{tpu_custom_call.1} parent=55 // pred_region
          %s457 = sand.u32 %s165, 1
          %s458 = scalar_lea.sflag [#allocation4], %s457
          %s459 = sand.u32 %s165, 1
          %s460 = smul.addr %s459, 8
          %s461 = scalar_lea.vmem [#allocation3], %s460
          %463 = dma.done %s458, 128
        $region60: #{tpu_custom_call.1} parent=55 // pred_fallthru
          _
      $region56: #{tpu_custom_call.1} parent=5 // pred_fallthru
        _
    $region6: #{tpu_custom_call.1} parent=1 // loop_footer
      %s18 = sadd.s32 1, %s14
    $region7: #{tpu_custom_call.1} parent=1 // loop_footer_branch
      %13 = sbr.rel target = $region3
    $region8: #{tpu_custom_call.1} parent=1 // loop_exit
      _
    %464 = vsyncpa [#allocation4], 1
    %s465 = scalar_lea.sflag [#allocation4], 1
    %466 = vsyncpa %s465, 1

</llo_original>
